<compile_context>
chip_gen: v6e
topology: v6e:2x2x1
jax: 0.10.0
libtpu: 0.0.40
codegen_flags: <defaults>
</compile_context>

<pallas_src>
import jax
import jax.numpy as jnp
from jax.experimental import pallas as pl
from jax.experimental.pallas import tpu as pltpu


def _round_up(v, m):
    return (v + m - 1) // m * m


def mlp_kernel(alpha_ref,                      # SMEM (3,) PReLU scalar params (f32)
               x_ref,                          # VMEM (tile_n, in_ft)       storage dtype
               w1s_ref, b1s_ref,               # VMEM (in_ft, 2*out_p), (1, 2*out_p)  [w1 || ws]
               w2_ref, b2_ref,                 # VMEM (out_p, out_p), (1, out_p)
               w3_ref, b3_ref,                 # VMEM (out_p, out_p), (1, out_p)
               o_ref):                         # VMEM (tile_n, out_p)
    out_p = o_ref.shape[-1]

    def prelu(v, a):
        return jnp.where(v >= 0.0, v, a * v)

    x = x_ref[...]

    # Fused first stage: one MXU pass computes Linear1 and the shortcut Linear.
    h0 = jnp.dot(x, w1s_ref[...], preferred_element_type=jnp.float32) + b1s_ref[...]
    h = h0[:, :out_p]          # ffn branch  (split on a 128-lane boundary)
    s = h0[:, out_p:]          # shortcut branch

    h = prelu(h, alpha_ref[0])
    h = jnp.dot(h.astype(w2_ref.dtype), w2_ref[...],
                preferred_element_type=jnp.float32) + b2_ref[...]
    h = prelu(h, alpha_ref[1])
    h = jnp.dot(h.astype(w3_ref.dtype), w3_ref[...],
                preferred_element_type=jnp.float32) + b3_ref[...]
    h = prelu(h, alpha_ref[2])

    o_ref[...] = (h + s).astype(o_ref.dtype)


def prepare_params(params, dtype=jnp.bfloat16):
    """One-time conversion from PyTorch Linear layout (out_ft, in_ft) into the
    transposed / padded / fused layout the kernel consumes. Do NOT call per step."""
    out_ft, in_ft = params["w1"].shape
    out_p = _round_up(out_ft, 128)   # lane-dense intermediates & output

    def wprep(w, cols):              # (out, in) -> transposed (in_ft, cols), zero-padded cols
        wt = jnp.transpose(w).astype(dtype)
        return jnp.zeros((in_ft, cols), dtype).at[:, : wt.shape[1]].set(wt)

    def wprep_sq(w, rows, cols):     # square layers: pad both dims with zeros
        wt = jnp.transpose(w).astype(dtype)
        return jnp.zeros((rows, cols), dtype).at[: wt.shape[0], : wt.shape[1]].set(wt)

    def bpad(b, cols):               # (out,) -> (1, cols) f32, zero-padded
        return jnp.zeros((1, cols), jnp.float32).at[0, : b.shape[0]].set(
            b.astype(jnp.float32))

    w1s = jnp.concatenate([wprep(params["w1"], out_p), wprep(params["ws"], out_p)], axis=1)
    b1s = jnp.concatenate([bpad(params["b1"], out_p), bpad(params["bs"], out_p)], axis=1)

    return {
        "alphas": jnp.stack(
            [params["a1"], params["a2"], params["a3"]]).astype(jnp.float32),
        "w1s": w1s, "b1s": b1s,
        "w2": wprep_sq(params["w2"], out_p, out_p), "b2": bpad(params["b2"], out_p),
        "w3": wprep_sq(params["w3"], out_p, out_p), "b3": bpad(params["b3"], out_p),
        "in_ft": in_ft, "out_ft": out_ft, "out_p": out_p, "dtype": dtype,
    }


def _vmem_capacity_bytes():
    try:
        return int(pltpu.get_tpu_info().vmem_capacity_bytes)
    except Exception:
        return 64 * 1024 * 1024      # conservative fallback (v7x per-TC size)


def mlp_pallas(x, p, tile_n=None, out_dtype=None, trim_features=True):
    n, in_ft = x.shape
    assert in_ft == p["in_ft"]
    out_p, out_ft = p["out_p"], p["out_ft"]
    w_dtype = p["dtype"]
    out_dtype = w_dtype if out_dtype is None else out_dtype
    w_item = jnp.dtype(w_dtype).itemsize
    o_item = jnp.dtype(out_dtype).itemsize

    if x.dtype != w_dtype:
        x = x.astype(w_dtype)        # ideally the producer already emits this dtype

    # ---- generation-aware VMEM budget --------------------------------------
    cap = _vmem_capacity_bytes()
    budget = (cap * 7) // 8          # ~112 MiB on v5e/v6e, ~56 MiB on v7x

    # Resident weights/biases; 2x because the pipeline may double-buffer
    # constant-index blocks (alternative: pipeline_mode=pl.Buffered(1)).
    weights_bytes = ((_round_up(in_ft, 8) * 2 * out_p + 2 * out_p * out_p) * w_item
                     + 4 * out_p * 4)
    resident_bytes = 2 * weights_bytes

    lanes_in = _round_up(in_ft, 128)                       # VMEM lane padding of x tile
    per_row = (2 * (lanes_in * w_item + out_p * o_item)    # double-buffered x / out tiles
               + 8 * out_p * 4)                            # f32 intermediates (h0, h, temps)

    if tile_n is None:
        avail = max(budget - resident_bytes - (2 << 20), per_row * 8)
        tile_max = max(8, min(1024, (avail // per_row) // 8 * 8))
        # Aim for >= ~8 grid steps so v7x's two TensorCores both get work and the
        # DMA pipeline has steps to overlap.
        tile_target = max(8, _round_up(pl.cdiv(n, 8), 8))
        tile_n = min(tile_max, tile_target)
    if n < tile_n:
        tile_n = n                                         # single full-extent block
    grid = (pl.cdiv(n, tile_n),)

    vmem_limit = int(min(max(resident_bytes + per_row * tile_n + (4 << 20),
                             16 * 1024 * 1024), budget))

    flops = 2 * n * (in_ft * 2 * out_p + 2 * out_p * out_p)
    bytes_accessed = n * in_ft * w_item + n * out_p * o_item + weights_bytes

    tiled = lambda i: (i, 0)          # x / out tiles march with the grid
    resident = lambda i: (0, 0)       # weights & biases stay put in VMEM

    out = pl.pallas_call(
        mlp_kernel,
        out_shape=jax.ShapeDtypeStruct((n, out_p), out_dtype),
        grid=grid,
        in_specs=[
            pl.BlockSpec(memory_space=pltpu.MemorySpace.SMEM),        # alphas
            pl.BlockSpec((tile_n, in_ft), tiled),                     # x tile (true K, no pad)
            pl.BlockSpec((in_ft, 2 * out_p), resident),               # w1 || ws
            pl.BlockSpec((1, 2 * out_p), resident),                   # b1 || bs
            pl.BlockSpec((out_p, out_p), resident),                   # w2
            pl.BlockSpec((1, out_p), resident),                       # b2
            pl.BlockSpec((out_p, out_p), resident),                   # w3
            pl.BlockSpec((1, out_p), resident),                       # b3
        ],
        out_specs=pl.BlockSpec((tile_n, out_p), tiled),
        compiler_params=pltpu.CompilerParams(
            dimension_semantics=("parallel",),
            vmem_limit_bytes=vmem_limit,
        ),
        cost_estimate=pl.CostEstimate(
            flops=int(flops), transcendentals=0, bytes_accessed=int(bytes_accessed)),
    )(p["alphas"], x, p["w1s"], p["b1s"], p["w2"], p["b2"], p["w3"], p["b3"])

    return out[:, :out_ft] if trim_features else out


def mlp_reference(x, p):
    def lin(h, w, bv):
        return h @ w.T + bv

    def prelu(h, a):
        return jnp.where(h >= 0.0, h, a * h)

    h = prelu(lin(x, p["w1"], p["b1"]), p["a1"])
    h = prelu(lin(h, p["w2"], p["b2"]), p["a2"])
    h = prelu(lin(h, p["w3"], p["b3"]), p["a3"])
    return h + lin(x, p["ws"], p["bs"])


def init_params(key, in_ft, out_ft):
    ks = jax.random.split(key, 8)

    def uni(k, shape, fan_in):
        lim = 1.0 / jnp.sqrt(fan_in)
        return jax.random.uniform(k, shape, jnp.float32, -lim, lim)

    return {
        "w1": uni(ks[0], (out_ft, in_ft), in_ft),
        "b1": uni(ks[1], (out_ft,), in_ft),
        "a1": jnp.float32(0.25),
        "w2": uni(ks[2], (out_ft, out_ft), out_ft),
        "b2": uni(ks[3], (out_ft,), out_ft),
        "a2": jnp.float32(0.25),
        "w3": uni(ks[4], (out_ft, out_ft), out_ft),
        "b3": uni(ks[5], (out_ft,), out_ft),
        "a3": jnp.float32(0.25),
        "ws": uni(ks[6], (out_ft, in_ft), in_ft),
        "bs": uni(ks[7], (out_ft,), in_ft),
    }


if __name__ == "__main__":
    key = jax.random.PRNGKey(0)
    k_x, k_p = jax.random.split(key)

    batch, in_ft, out_ft = 64, 16, 32
    x = jax.random.normal(k_x, (batch, in_ft), jnp.float32)
    params = init_params(k_p, in_ft, out_ft)

    prepared = prepare_params(params, dtype=jnp.bfloat16)  # one-time layout prep
    out = mlp_pallas(x, prepared)
    out = jax.block_until_ready(out)

    ref = mlp_reference(x, params)
    assert out.shape == (batch, out_ft)
    # bf16 storage -> looser tolerance than the previous f32 run (expected precision loss).
    assert jnp.allclose(out.astype(jnp.float32), ref, atol=5e-2, rtol=5e-2), \
        "mismatch vs reference"

    print("KERNEL_OK")
</pallas_src>

<mosaic_0001>
module attributes {stable_mosaic.version = 11 : i64} {
  func.func @mlp_kernel(%arg0: i32, %arg1: memref<3xf32, #tpu.memory_space<smem>>, %arg2: memref<8x16xbf16, #tpu.memory_space<vmem>>, %arg3: memref<16x256xbf16, #tpu.memory_space<vmem>>, %arg4: memref<1x256xf32, #tpu.memory_space<vmem>>, %arg5: memref<128x128xbf16, #tpu.memory_space<vmem>>, %arg6: memref<1x128xf32, #tpu.memory_space<vmem>>, %arg7: memref<128x128xbf16, #tpu.memory_space<vmem>>, %arg8: memref<1x128xf32, #tpu.memory_space<vmem>>, %arg9: memref<8x128xbf16, #tpu.memory_space<vmem>>) attributes {dimension_semantics = [#tpu.dimension_semantics<parallel>], iteration_bounds = array<i64: 8>, scalar_prefetch = 0 : i64, scratch_operands = 0 : i64, tpu.core_type = #tpu.core_type<tc>, window_params = [{transform_indices = @transform_0, window_bounds = array<i64: 3>}, {transform_indices = @transform_1, window_bounds = array<i64: 8, 16>}, {pipeline_mode = #tpu.pipeline_mode<synchronous>, transform_indices = @transform_2, window_bounds = array<i64: 16, 256>}, {pipeline_mode = #tpu.pipeline_mode<synchronous>, transform_indices = @transform_3, window_bounds = array<i64: 1, 256>}, {pipeline_mode = #tpu.pipeline_mode<synchronous>, transform_indices = @transform_4, window_bounds = array<i64: 128, 128>}, {pipeline_mode = #tpu.pipeline_mode<synchronous>, transform_indices = @transform_5, window_bounds = array<i64: 1, 128>}, {pipeline_mode = #tpu.pipeline_mode<synchronous>, transform_indices = @transform_6, window_bounds = array<i64: 128, 128>}, {pipeline_mode = #tpu.pipeline_mode<synchronous>, transform_indices = @transform_7, window_bounds = array<i64: 1, 128>}, {transform_indices = @transform_8, window_bounds = array<i64: 8, 128>}]} {
    %c0 = arith.constant 0 : index
    %c0_0 = arith.constant 0 : index
    %0 = vector.load %arg2[%c0, %c0_0] : memref<8x16xbf16, #tpu.memory_space<vmem>>, vector<8x16xbf16>
    %c0_1 = arith.constant 0 : index
    %c0_2 = arith.constant 0 : index
    %1 = vector.load %arg3[%c0_1, %c0_2] : memref<16x256xbf16, #tpu.memory_space<vmem>>, vector<16x256xbf16>
    %cst = arith.constant dense<0.000000e+00> : vector<8x256xf32>
    %2 = tpu.matmul %0, %1, %cst {dimension_numbers = #tpu.dot_dimension_numbers<[1], [0], [0], [1], [0, 0, 1, 1], [], []>} : vector<8x16xbf16>, vector<16x256xbf16>, vector<8x256xf32> -> vector<8x256xf32>
    %c0_3 = arith.constant 0 : index
    %c0_4 = arith.constant 0 : index
    %3 = vector.load %arg4[%c0_3, %c0_4] : memref<1x256xf32, #tpu.memory_space<vmem>>, vector<1x256xf32>
    %4 = vector.broadcast %3 : vector<1x256xf32> to vector<8x256xf32>
    %5 = arith.addf %2, %4 : vector<8x256xf32>
    %6 = vector.extract_strided_slice %5 {offsets = [0, 0], sizes = [8, 128], strides = [1, 1]} : vector<8x256xf32> to vector<8x128xf32>
    %7 = vector.extract_strided_slice %5 {offsets = [0, 128], sizes = [8, 128], strides = [1, 1]} : vector<8x256xf32> to vector<8x128xf32>
    %c0_5 = arith.constant 0 : index
    %8 = memref.load %arg1[%c0_5] : memref<3xf32, #tpu.memory_space<smem>>
    %cst_6 = arith.constant 0.000000e+00 : f32
    %9 = vector.broadcast %cst_6 : f32 to vector<8x128xf32>
    %10 = arith.cmpf oge, %6, %9 : vector<8x128xf32>
    %11 = vector.broadcast %8 : f32 to vector<8x128xf32>
    %12 = arith.mulf %11, %6 : vector<8x128xf32>
    %13 = arith.select %10, %6, %12 : vector<8x128xi1>, vector<8x128xf32>
    %14 = arith.truncf %13 : vector<8x128xf32> to vector<8x128xbf16>
    %c0_7 = arith.constant 0 : index
    %c0_8 = arith.constant 0 : index
    %15 = vector.load %arg5[%c0_7, %c0_8] : memref<128x128xbf16, #tpu.memory_space<vmem>>, vector<128x128xbf16>
    %cst_9 = arith.constant dense<0.000000e+00> : vector<8x128xf32>
    %16 = tpu.matmul %14, %15, %cst_9 {dimension_numbers = #tpu.dot_dimension_numbers<[1], [0], [0], [1], [0, 0, 1, 1], [], []>} : vector<8x128xbf16>, vector<128x128xbf16>, vector<8x128xf32> -> vector<8x128xf32>
    %c0_10 = arith.constant 0 : index
    %c0_11 = arith.constant 0 : index
    %17 = vector.load %arg6[%c0_10, %c0_11] : memref<1x128xf32, #tpu.memory_space<vmem>>, vector<1x128xf32>
    %18 = vector.broadcast %17 : vector<1x128xf32> to vector<8x128xf32>
    %19 = arith.addf %16, %18 : vector<8x128xf32>
    %c1 = arith.constant 1 : index
    %20 = memref.load %arg1[%c1] : memref<3xf32, #tpu.memory_space<smem>>
    %cst_12 = arith.constant 0.000000e+00 : f32
    %21 = vector.broadcast %cst_12 : f32 to vector<8x128xf32>
    %22 = arith.cmpf oge, %19, %21 : vector<8x128xf32>
    %23 = vector.broadcast %20 : f32 to vector<8x128xf32>
    %24 = arith.mulf %23, %19 : vector<8x128xf32>
    %25 = arith.select %22, %19, %24 : vector<8x128xi1>, vector<8x128xf32>
    %26 = arith.truncf %25 : vector<8x128xf32> to vector<8x128xbf16>
    %c0_13 = arith.constant 0 : index
    %c0_14 = arith.constant 0 : index
    %27 = vector.load %arg7[%c0_13, %c0_14] : memref<128x128xbf16, #tpu.memory_space<vmem>>, vector<128x128xbf16>
    %cst_15 = arith.constant dense<0.000000e+00> : vector<8x128xf32>
    %28 = tpu.matmul %26, %27, %cst_15 {dimension_numbers = #tpu.dot_dimension_numbers<[1], [0], [0], [1], [0, 0, 1, 1], [], []>} : vector<8x128xbf16>, vector<128x128xbf16>, vector<8x128xf32> -> vector<8x128xf32>
    %c0_16 = arith.constant 0 : index
    %c0_17 = arith.constant 0 : index
    %29 = vector.load %arg8[%c0_16, %c0_17] : memref<1x128xf32, #tpu.memory_space<vmem>>, vector<1x128xf32>
    %30 = vector.broadcast %29 : vector<1x128xf32> to vector<8x128xf32>
    %31 = arith.addf %28, %30 : vector<8x128xf32>
    %c2 = arith.constant 2 : index
    %32 = memref.load %arg1[%c2] : memref<3xf32, #tpu.memory_space<smem>>
    %cst_18 = arith.constant 0.000000e+00 : f32
    %33 = vector.broadcast %cst_18 : f32 to vector<8x128xf32>
    %34 = arith.cmpf oge, %31, %33 : vector<8x128xf32>
    %35 = vector.broadcast %32 : f32 to vector<8x128xf32>
    %36 = arith.mulf %35, %31 : vector<8x128xf32>
    %37 = arith.select %34, %31, %36 : vector<8x128xi1>, vector<8x128xf32>
    %38 = arith.addf %37, %7 : vector<8x128xf32>
    %39 = arith.truncf %38 : vector<8x128xf32> to vector<8x128xbf16>
    %c0_19 = arith.constant 0 : index
    %c0_20 = arith.constant 0 : index
    %40 = vector.load %arg9[%c0_19, %c0_20] : memref<8x128xbf16, #tpu.memory_space<vmem>>, vector<8x128xbf16>
    tpu.vector_store %arg9[%c0_19, %c0_20], %39 {strides = array<i32>} : memref<8x128xbf16, #tpu.memory_space<vmem>>, vector<8x128xbf16>,
    return
  }
  func.func @transform_0(%arg0: i32) -> i32 {
    %c0_i32 = arith.constant 0 : i32
    %c0_i32_0 = arith.constant 0 : i32
    return %c0_i32 : i32
  }
  func.func @transform_1(%arg0: i32) -> (i32, i32) {
    %c0_i32 = arith.constant 0 : i32
    %c0_i32_0 = arith.constant 0 : i32
    return %arg0, %c0_i32 : i32, i32
  }
  func.func @transform_2(%arg0: i32) -> (i32, i32) {
    %c0_i32 = arith.constant 0 : i32
    %c0_i32_0 = arith.constant 0 : i32
    %c0_i32_1 = arith.constant 0 : i32
    return %c0_i32, %c0_i32_0 : i32, i32
  }
  func.func @transform_3(%arg0: i32) -> (i32, i32) {
    %c0_i32 = arith.constant 0 : i32
    %c0_i32_0 = arith.constant 0 : i32
    %c0_i32_1 = arith.constant 0 : i32
    return %c0_i32, %c0_i32_0 : i32, i32
  }
  func.func @transform_4(%arg0: i32) -> (i32, i32) {
    %c0_i32 = arith.constant 0 : i32
    %c0_i32_0 = arith.constant 0 : i32
    %c0_i32_1 = arith.constant 0 : i32
    return %c0_i32, %c0_i32_0 : i32, i32
  }
  func.func @transform_5(%arg0: i32) -> (i32, i32) {
    %c0_i32 = arith.constant 0 : i32
    %c0_i32_0 = arith.constant 0 : i32
    %c0_i32_1 = arith.constant 0 : i32
    return %c0_i32, %c0_i32_0 : i32, i32
  }
  func.func @transform_6(%arg0: i32) -> (i32, i32) {
    %c0_i32 = arith.constant 0 : i32
    %c0_i32_0 = arith.constant 0 : i32
    %c0_i32_1 = arith.constant 0 : i32
    return %c0_i32, %c0_i32_0 : i32, i32
  }
  func.func @transform_7(%arg0: i32) -> (i32, i32) {
    %c0_i32 = arith.constant 0 : i32
    %c0_i32_0 = arith.constant 0 : i32
    %c0_i32_1 = arith.constant 0 : i32
    return %c0_i32, %c0_i32_0 : i32, i32
  }
  func.func @transform_8(%arg0: i32) -> (i32, i32) {
    %c0_i32 = arith.constant 0 : i32
    %c0_i32_0 = arith.constant 0 : i32
    return %arg0, %c0_i32 : i32, i32
  }
}

</mosaic_0001>

<llo_original>
// kernel: tpu_custom_call.1
$region0: #{tpu_custom_call.1}
  #allocation0 [shape = 'u32[]', space=smem, size = 0x4, offset = 0x4, fixed_abs, tag = 'smem constant byte address 0x4 - core index']
  #allocation1 [shape = 'u32[144,128]{1,0:T(1,128)}', space=vmem, size = 0x12000, scoped, tag = 'internal scratch']
  %s0 = inlined_call_operand.vmem [shape: f32[3], index: 0, kind: input, shape index: {}]
  %s1 = inlined_call_operand.vmem [shape: bf16[64,16], index: 1, kind: input, shape index: {}]
  %s2 = inlined_call_operand.vmem [shape: bf16[16,256], index: 2, kind: input, shape index: {}]
  %s3 = inlined_call_operand.vmem [shape: f32[1,256], index: 3, kind: input, shape index: {}]
  %s4 = inlined_call_operand.hbm [shape: bf16[128,128], index: 4, kind: input, shape index: {}]
  %s5 = inlined_call_operand.vmem [shape: f32[1,128], index: 5, kind: input, shape index: {}]
  %s6 = inlined_call_operand.hbm [shape: bf16[128,128], index: 6, kind: input, shape index: {}]
  %s7 = inlined_call_operand.vmem [shape: f32[1,128], index: 7, kind: input, shape index: {}]
  %s8 = inlined_call_operand.hbm [shape: bf16[64,128], index: 8, kind: output, shape index: {}]
  %s9 = sld [smem:[#allocation0]]
  $region77: #{tpu_custom_call.1} parent=0
    _
  %s11 = ssub.s32 1, %s9
  %s12 = scalar_select 0, %s11, %s9
  $region1: #{tpu_custom_call.1} parent=0
    #allocation2 [shape = 'u8[512]{0}', space=smem, size = 0x200, scoped, tag = 'input window, operand 0, single buffered']
    #allocation3 [shape = 's32[2]{0}', space=sflag, size = 0x8, scoped, tag = 'scoped memory for tpu_custom_call.1']
    #allocation4 [shape = 's32[2]{0}', space=sflag, size = 0x8, scoped, tag = 'scoped memory for tpu_custom_call.1']
    #allocation5 [shape = 's32[2]{0}', space=sflag, size = 0x8, scoped, tag = 'scoped memory for tpu_custom_call.1']
    #allocation6 [shape = 'u8[32768]{0}', space=vmem, size = 0x8000, scoped, tag = 'input window, operand 4, single buffered']
    #allocation7 [shape = 'u8[32768]{0}', space=vmem, size = 0x8000, scoped, tag = 'input window, operand 6, single buffered']
    #allocation8 [shape = 's32[1]{0}', space=sflag, size = 0x4, scoped, tag = 'scoped memory for tpu_custom_call.1']
    #allocation9 [shape = 'u8[4096]{0}', space=vmem, size = 0x1000, scoped, tag = 'output window, operand 0']
    %13 = vsyncpa [#allocation5], 0
    %14 = vsyncpa [#allocation3], 0
    %15 = vsyncpa [#allocation8], 0
    %16 = vsyncpa [#allocation4], 0
    %s17 = scalar_lea.sflag [#allocation4], 1
    %18 = vsyncpa %s17, 0
    loop: start=0, step=1, limit=10
    $region2: #{tpu_custom_call.1} parent=1 // loop_pre_header
      _
    $region3: #{tpu_custom_call.1} parent=1 // loop_header
      %s20 = sphi 0, %s24
      %p21 = scmp.ge.s32.totalorder %s20, 10
      %s28 = sphi 0, %s28
      %s30 = sphi 0, %s28
      %s31 = sphi 0, %s30
      %s45 = sphi 0, %s31
      %s51 = sphi 0, %s53
      %s54 = sphi 0, %s51
      %s55 = sphi 0, %s54
      %s71 = sphi 0, %s55
      %s75 = sphi 0, %s75
      %s77 = sphi 0, %s75
      %s78 = sphi 0, %s77
      %s92 = sphi 0, %s78
      %s96 = sphi 0, %s96
      %s98 = sphi 0, %s96
      %s99 = sphi 0, %s98
      %s113 = sphi 0, %s99
      %s117 = sphi 0, %s117
      %s119 = sphi 0, %s117
      %s120 = sphi 0, %s119
      %s134 = sphi 0, %s120
      %s138 = sphi 0, %s138
      %s140 = sphi 0, %s138
      %s141 = sphi 0, %s140
      %s155 = sphi 0, %s141
      %s159 = sphi 0, %s159
      %s161 = sphi 0, %s159
      %s162 = sphi 0, %s161
      %s176 = sphi 0, %s162
      %s180 = sphi 0, %s180
      %s182 = sphi 0, %s180
      %s183 = sphi 0, %s182
      %s197 = sphi 0, %s183
      %s203 = sphi 0, %s205
      %s206 = sphi 0, %s203
      %s207 = sphi 0, %s206
      %s223 = sphi 0, %s207
    $region4: #{tpu_custom_call.1} parent=1 // loop_header_branch
      %23 = sbr.rel (%p21) target = $region8
    $region5: #{tpu_custom_call.1} parent=1 // loop_body
      %s25 = ssub.s32 %s20, 1
      %s26 = ssub.s32 %s20, 2
      %s27 = sadd.s32 %s20, 1
      %s29 = sadd.s32 %s28, 1
      %p32 = scmp.eq.s32.totalorder %s20, 7
      %p33 = scmp.ne.s32.totalorder %s28, %s30
      %p34 = scmp.eq.s32.totalorder %s20, 0
      %p35 = por %p33, %p34
      %p36 = scmp.ne.s32.totalorder %s28, %s30
      %p37 = scmp.eq.s32.totalorder %s25, 7
      %p38 = por %p36, %p37
      %p39 = scmp.ne.s32.totalorder %s30, %s31
      %p40 = scmp.eq.s32.totalorder %s25, 0
      %p41 = por %p39, %p40
      %p42 = scmp.ne.s32.totalorder %s30, %s31
      %p43 = scmp.eq.s32.totalorder %s26, 7
      %p44 = por %p42, %p43
      %p46 = scmp.ne.s32.totalorder %s31, %s45
      %p47 = scmp.eq.s32.totalorder %s26, 0
      %p48 = por %p46, %p47
      %s49 = ssub.s32 %s20, %s27
      %p50 = scmp.eq.s32.totalorder %s49, 0
      %s52 = sadd.s32 %s51, 1
      %s53 = scalar_select %p50, %s51, %s52
      %p56 = pneg %p50
      %p57 = scmp.eq.s32.totalorder %s20, 7
      %p58 = por %p56, %p57
      %p59 = scmp.ne.s32.totalorder %s51, %s54
      %p60 = scmp.eq.s32.totalorder %s20, 0
      %p61 = por %p59, %p60
      %p62 = scmp.ne.s32.totalorder %s51, %s54
      %p63 = scmp.eq.s32.totalorder %s25, 7
      %p64 = por %p62, %p63
      %p65 = scmp.ne.s32.totalorder %s54, %s55
      %p66 = scmp.eq.s32.totalorder %s25, 0
      %p67 = por %p65, %p66
      %p68 = scmp.ne.s32.totalorder %s54, %s55
      %p69 = scmp.eq.s32.totalorder %s26, 7
      %p70 = por %p68, %p69
      %p72 = scmp.ne.s32.totalorder %s55, %s71
      %p73 = scmp.eq.s32.totalorder %s26, 0
      %p74 = por %p72, %p73
      %s76 = sadd.s32 %s75, 1
      %p79 = scmp.eq.s32.totalorder %s20, 7
      %p80 = scmp.ne.s32.totalorder %s75, %s77
      %p81 = scmp.eq.s32.totalorder %s20, 0
      %p82 = por %p80, %p81
      %p83 = scmp.ne.s32.totalorder %s75, %s77
      %p84 = scmp.eq.s32.totalorder %s25, 7
      %p85 = por %p83, %p84
      %p86 = scmp.ne.s32.totalorder %s77, %s78
      %p87 = scmp.eq.s32.totalorder %s25, 0
      %p88 = por %p86, %p87
      %p89 = scmp.ne.s32.totalorder %s77, %s78
      %p90 = scmp.eq.s32.totalorder %s26, 7
      %p91 = por %p89, %p90
      %p93 = scmp.ne.s32.totalorder %s78, %s92
      %p94 = scmp.eq.s32.totalorder %s26, 0
      %p95 = por %p93, %p94
      %s97 = sadd.s32 %s96, 1
      %p100 = scmp.eq.s32.totalorder %s20, 7
      %p101 = scmp.ne.s32.totalorder %s96, %s98
      %p102 = scmp.eq.s32.totalorder %s20, 0
      %p103 = por %p101, %p102
      %p104 = scmp.ne.s32.totalorder %s96, %s98
      %p105 = scmp.eq.s32.totalorder %s25, 7
      %p106 = por %p104, %p105
      %p107 = scmp.ne.s32.totalorder %s98, %s99
      %p108 = scmp.eq.s32.totalorder %s25, 0
      %p109 = por %p107, %p108
      %p110 = scmp.ne.s32.totalorder %s98, %s99
      %p111 = scmp.eq.s32.totalorder %s26, 7
      %p112 = por %p110, %p111
      %p114 = scmp.ne.s32.totalorder %s99, %s113
      %p115 = scmp.eq.s32.totalorder %s26, 0
      %p116 = por %p114, %p115
      %s118 = sadd.s32 %s117, 1
      %p121 = scmp.eq.s32.totalorder %s20, 7
      %p122 = scmp.ne.s32.totalorder %s117, %s119
      %p123 = scmp.eq.s32.totalorder %s20, 0
      %p124 = por %p122, %p123
      %p125 = scmp.ne.s32.totalorder %s117, %s119
      %p126 = scmp.eq.s32.totalorder %s25, 7
      %p127 = por %p125, %p126
      %p128 = scmp.ne.s32.totalorder %s119, %s120
      %p129 = scmp.eq.s32.totalorder %s25, 0
      %p130 = por %p128, %p129
      %p131 = scmp.ne.s32.totalorder %s119, %s120
      %p132 = scmp.eq.s32.totalorder %s26, 7
      %p133 = por %p131, %p132
      %p135 = scmp.ne.s32.totalorder %s120, %s134
      %p136 = scmp.eq.s32.totalorder %s26, 0
      %p137 = por %p135, %p136
      %s139 = sadd.s32 %s138, 1
      %p142 = scmp.eq.s32.totalorder %s20, 7
      %p143 = scmp.ne.s32.totalorder %s138, %s140
      %p144 = scmp.eq.s32.totalorder %s20, 0
      %p145 = por %p143, %p144
      %p146 = scmp.ne.s32.totalorder %s138, %s140
      %p147 = scmp.eq.s32.totalorder %s25, 7
      %p148 = por %p146, %p147
      %p149 = scmp.ne.s32.totalorder %s140, %s141
      %p150 = scmp.eq.s32.totalorder %s25, 0
      %p151 = por %p149, %p150
      %p152 = scmp.ne.s32.totalorder %s140, %s141
      %p153 = scmp.eq.s32.totalorder %s26, 7
      %p154 = por %p152, %p153
      %p156 = scmp.ne.s32.totalorder %s141, %s155
      %p157 = scmp.eq.s32.totalorder %s26, 0
      %p158 = por %p156, %p157
      %s160 = sadd.s32 %s159, 1
      %p163 = scmp.eq.s32.totalorder %s20, 7
      %p164 = scmp.ne.s32.totalorder %s159, %s161
      %p165 = scmp.eq.s32.totalorder %s20, 0
      %p166 = por %p164, %p165
      %p167 = scmp.ne.s32.totalorder %s159, %s161
      %p168 = scmp.eq.s32.totalorder %s25, 7
      %p169 = por %p167, %p168
      %p170 = scmp.ne.s32.totalorder %s161, %s162
      %p171 = scmp.eq.s32.totalorder %s25, 0
      %p172 = por %p170, %p171
      %p173 = scmp.ne.s32.totalorder %s161, %s162
      %p174 = scmp.eq.s32.totalorder %s26, 7
      %p175 = por %p173, %p174
      %p177 = scmp.ne.s32.totalorder %s162, %s176
      %p178 = scmp.eq.s32.totalorder %s26, 0
      %p179 = por %p177, %p178
      %s181 = sadd.s32 %s180, 1
      %p184 = scmp.eq.s32.totalorder %s20, 7
      %p185 = scmp.ne.s32.totalorder %s180, %s182
      %p186 = scmp.eq.s32.totalorder %s20, 0
      %p187 = por %p185, %p186
      %p188 = scmp.ne.s32.totalorder %s180, %s182
      %p189 = scmp.eq.s32.totalorder %s25, 7
      %p190 = por %p188, %p189
      %p191 = scmp.ne.s32.totalorder %s182, %s183
      %p192 = scmp.eq.s32.totalorder %s25, 0
      %p193 = por %p191, %p192
      %p194 = scmp.ne.s32.totalorder %s182, %s183
      %p195 = scmp.eq.s32.totalorder %s26, 7
      %p196 = por %p194, %p195
      %p198 = scmp.ne.s32.totalorder %s183, %s197
      %p199 = scmp.eq.s32.totalorder %s26, 0
      %p200 = por %p198, %p199
      %s201 = ssub.s32 %s20, %s27
      %p202 = scmp.eq.s32.totalorder %s201, 0
      %s204 = sadd.s32 %s203, 1
      %s205 = scalar_select %p202, %s203, %s204
      %p208 = pneg %p202
      %p209 = scmp.eq.s32.totalorder %s20, 7
      %p210 = por %p208, %p209
      %p211 = scmp.ne.s32.totalorder %s203, %s206
      %p212 = scmp.eq.s32.totalorder %s20, 0
      %p213 = por %p211, %p212
      %p214 = scmp.ne.s32.totalorder %s203, %s206
      %p215 = scmp.eq.s32.totalorder %s25, 7
      %p216 = por %p214, %p215
      %p217 = scmp.ne.s32.totalorder %s206, %s207
      %p218 = scmp.eq.s32.totalorder %s25, 0
      %p219 = por %p217, %p218
      %p220 = scmp.ne.s32.totalorder %s206, %s207
      %p221 = scmp.eq.s32.totalorder %s26, 7
      %p222 = por %p220, %p221
      %p224 = scmp.ne.s32.totalorder %s207, %s223
      %p225 = scmp.eq.s32.totalorder %s26, 0
      %p226 = por %p224, %p225
      %p227 = scmp.le.s32.totalorder 1, %s20
      %p228 = scmp.lt.s32.totalorder %s20, 9
      %p229 = pnand %p227, %p228
      %p230 = pneg %p229
      // Predicated region
      $region9: #{tpu_custom_call.1} parent=5 // pred_check
        _
      $region10: #{tpu_custom_call.1} parent=5 // pred_check_branch
        %232 = sbr.rel (%p229) target = $region12
      $region11: #{tpu_custom_call.1} parent=5 // pred_region
        %s233 = ssub.s32 %s20, 1
        // Predicated region
        $region13: #{tpu_custom_call.1} parent=11 // pred_check
          %p234 = pneg %p41
        $region14: #{tpu_custom_call.1} parent=11 // pred_check_branch
          %236 = sbr.rel (%p234) target = $region16
        $region15: #{tpu_custom_call.1} parent=11 // pred_region
          %s238 = ssub.s32 16, 16
          %239 = vsyncadd [#allocation5], %s238
          %s241 = sshll.u32 %s0, 4
          %s242 = int_to_ptr.vmem [resolvable:$true] %s241
          %244 = dma.vmem_to_smem %s242, 16, [#allocation2], [#allocation5]
        $region16: #{tpu_custom_call.1} parent=11 // pred_fallthru
          _
        // Predicated region
        $region17: #{tpu_custom_call.1} parent=11 // pred_check
          %p245 = pneg %p88
        $region18: #{tpu_custom_call.1} parent=11 // pred_check_branch
          %247 = sbr.rel (%p245) target = $region20
        $region19: #{tpu_custom_call.1} parent=11 // pred_region
          _
        $region20: #{tpu_custom_call.1} parent=11 // pred_fallthru
          _
        // Predicated region
        $region21: #{tpu_custom_call.1} parent=11 // pred_check
          %p248 = pneg %p109
        $region22: #{tpu_custom_call.1} parent=11 // pred_check_branch
          %250 = sbr.rel (%p248) target = $region24
        $region23: #{tpu_custom_call.1} parent=11 // pred_region
          _
        $region24: #{tpu_custom_call.1} parent=11 // pred_fallthru
          _
        // Predicated region
        $region25: #{tpu_custom_call.1} parent=11 // pred_check
          %p251 = pneg %p130
        $region26: #{tpu_custom_call.1} parent=11 // pred_check_branch
          %253 = sbr.rel (%p251) target = $region28
        $region27: #{tpu_custom_call.1} parent=11 // pred_region
          %s255 = ssub.s32 1024, 1024
          %256 = vsyncadd [#allocation3], %s255
          %s257 = sshll.u32 [#allocation6], 4
          %s258 = int_to_ptr.vmem [resolvable:$true] %s257
          %263 = dma.hbm_to_vmem [thread:$0]  %s4, 1024, %s258, [#allocation3], 64, 64, 4
        $region28: #{tpu_custom_call.1} parent=11 // pred_fallthru
          _
        // Predicated region
        $region29: #{tpu_custom_call.1} parent=11 // pred_check
          %p264 = pneg %p151
        $region30: #{tpu_custom_call.1} parent=11 // pred_check_branch
          %266 = sbr.rel (%p264) target = $region32
        $region31: #{tpu_custom_call.1} parent=11 // pred_region
          _
        $region32: #{tpu_custom_call.1} parent=11 // pred_fallthru
          _
        // Predicated region
        $region33: #{tpu_custom_call.1} parent=11 // pred_check
          %p267 = pneg %p172
        $region34: #{tpu_custom_call.1} parent=11 // pred_check_branch
          %269 = sbr.rel (%p267) target = $region36
        $region35: #{tpu_custom_call.1} parent=11 // pred_region
          %s271 = ssub.s32 1024, 1024
          %272 = vsyncadd [#allocation8], %s271
          %s273 = sshll.u32 [#allocation7], 4
          %s274 = int_to_ptr.vmem [resolvable:$true] %s273
          %279 = dma.hbm_to_vmem [thread:$0]  %s6, 1024, %s274, [#allocation8], 64, 64, 4
        $region36: #{tpu_custom_call.1} parent=11 // pred_fallthru
          _
        // Predicated region
        $region37: #{tpu_custom_call.1} parent=11 // pred_check
          %p280 = pneg %p193
        $region38: #{tpu_custom_call.1} parent=11 // pred_check_branch
          %282 = sbr.rel (%p280) target = $region40
        $region39: #{tpu_custom_call.1} parent=11 // pred_region
          _
        $region40: #{tpu_custom_call.1} parent=11 // pred_fallthru
          _
      $region12: #{tpu_custom_call.1} parent=5 // pred_fallthru
        _
      %p283 = scmp.lt.s32.totalorder %s20, 8
      // Predicated region
      $region41: #{tpu_custom_call.1} parent=5 // pred_check
        %p284 = pneg %p283
      $region42: #{tpu_custom_call.1} parent=5 // pred_check_branch
        %286 = sbr.rel (%p284) target = $region44
      $region43: #{tpu_custom_call.1} parent=5 // pred_region
        // Predicated region
        $region45: #{tpu_custom_call.1} parent=43 // pred_check
          %p287 = pneg %p61
        $region46: #{tpu_custom_call.1} parent=43 // pred_check_branch
          %289 = sbr.rel (%p287) target = $region48
        $region47: #{tpu_custom_call.1} parent=43 // pred_region
          %p290 = scmp.lt.s32.totalorder %s20, 7
          %s291 = scalar_select %p290, %s20, 7
          %s292 = smul.addr %s291, 4
          %s293 = scalar_lea.vmem %s1, %s292
        $region48: #{tpu_custom_call.1} parent=43 // pred_fallthru
          _
      $region44: #{tpu_custom_call.1} parent=5 // pred_fallthru
        _
      %p294 = scmp.le.s32.totalorder 1, %s20
      %p295 = scmp.lt.s32.totalorder %s20, 9
      %p296 = pnand %p294, %p295
      %p297 = pneg %p296
      // Predicated region
      $region49: #{tpu_custom_call.1} parent=5 // pred_check
        _
      $region50: #{tpu_custom_call.1} parent=5 // pred_check_branch
        %299 = sbr.rel (%p296) target = $region52
      $region51: #{tpu_custom_call.1} parent=5 // pred_region
        %s300 = ssub.s32 %s20, 1
        // Predicated region
        $region53: #{tpu_custom_call.1} parent=51 // pred_check
          %p301 = pneg %p41
        $region54: #{tpu_custom_call.1} parent=51 // pred_check_branch
          %303 = sbr.rel (%p301) target = $region56
        $region55: #{tpu_custom_call.1} parent=51 // pred_region
          %304 = dma.done [#allocation5], 16
        $region56: #{tpu_custom_call.1} parent=51 // pred_fallthru
          _
        // Predicated region
        $region57: #{tpu_custom_call.1} parent=51 // pred_check
          %p305 = pneg %p130
        $region58: #{tpu_custom_call.1} parent=51 // pred_check_branch
          %307 = sbr.rel (%p305) target = $region60
        $region59: #{tpu_custom_call.1} parent=51 // pred_region
          %308 = dma.done [#allocation3], 1024
        $region60: #{tpu_custom_call.1} parent=51 // pred_fallthru
          _
        // Predicated region
        $region61: #{tpu_custom_call.1} parent=51 // pred_check
          %p309 = pneg %p172
        $region62: #{tpu_custom_call.1} parent=51 // pred_check_branch
          %311 = sbr.rel (%p309) target = $region64
        $region63: #{tpu_custom_call.1} parent=51 // pred_region
          %312 = dma.done [#allocation8], 1024
        $region64: #{tpu_custom_call.1} parent=51 // pred_fallthru
          _
        %313 = sfence
        %p314 = pneg %p41
        %p315 = pneg %p38
        %p316 = scmp.lt.s32.totalorder %s25, 7
        %s317 = scalar_select %p316, %s25, 7
        %s318 = smul.addr %s317, 4
        %s319 = scalar_lea.vmem %s1, %s318
        %p320 = pneg %p67
        %p321 = pneg %p64
        %p322 = pneg %p88
        %p323 = pneg %p85
        %p324 = pneg %p109
        %p325 = pneg %p106
        %p326 = pneg %p130
        %p327 = pneg %p127
        %p328 = pneg %p151
        %p329 = pneg %p148
        %p330 = pneg %p172
        %p331 = pneg %p169
        %p332 = pneg %p193
        %p333 = pneg %p190
        %p334 = pneg %p219
        %p335 = pneg %p216
        %s336 = sand.u32 %s206, 1
        %s337 = scalar_lea.sflag [#allocation4], %s336
        %s338 = sand.u32 %s206, 1
        %s339 = smul.addr %s338, 4
        %s340 = scalar_lea.vmem [#allocation9], %s339
        %p341 = scmp.lt.s32.totalorder %s25, 7
        %s342 = scalar_select %p341, %s25, 7
        %s343 = smul.addr %s342, 4
        %s344 = scalar_lea.vmem %s1, %s343
        %v346 = vld [vmem:[%s344] sm:$0xf]
        %v347 = vld [vmem:[%s2] sm:$0xff]
        %v348 = vld [vmem:[%s2 + $0x8] sm:$0xff]
        %v349 = vld [vmem:[%s3] sm:$0x3]
        %v351 = vlaneseq
        %v352 = vshrl.u32 %v351, 7
        %v353 = vsub.s32 0, %v352
        %v354 = vrot.slane %v349, %v353
        %v355 = vlaneseq
        %v356 = vshrl.u32 %v355, 7
        %v357 = vsub.s32 1, %v356
        %v358 = vrot.slane %v349, %v357
        %v363 = vunpack.c.l.b16 %v347
        %v364 = vunpack.c.h.b16 %v347
        %v365 = vunpack.c.l.b16 %v348
        %v366 = vunpack.c.h.b16 %v348
        %v367 = vpack.c.b16 %v365, %v363
        %v368 = vpack.c.b16 %v366, %v364
        %vm371 = vcmask 130048
        %v373 = vsel %vm371, %v346, 0
        %375 = vmatprep.subr.bf16.mxu0 0
        %376 = vmatpush1.bf16.msra.mxu0 0
        %377 = vmatprep.subr.bf16.mxu0 0
        %378 = vmatpush1.bf16.msra.mxu0 0
        %379 = vmatprep.subr.bf16.mxu0 0
        %380 = vmatpush1.bf16.msra.mxu0 0
        %381 = vmatprep.subr.bf16.mxu0 0
        %382 = vmatpush1.bf16.msra.mxu0 0
        %383 = vmatprep.subr.bf16.mxu0 0
        %384 = vmatpush1.bf16.msra.mxu0 0
        %385 = vmatprep.subr.bf16.mxu0 0
        %386 = vmatpush1.bf16.msra.mxu0 0
        %387 = vmatprep.subr.bf16.mxu0 0
        %388 = vmatpush1.bf16.msra.mxu0 0
        %389 = vmatprep.subr.bf16.mxu0 %v368
        %390 = vmatpush1.bf16.msra.mxu0 %v367
        %391 = vmatprep.subr.bf16.mxu0 0
        %392 = vmatpush2.bf16.msra.mxu0 0
        %393 = vmatprep.subr.bf16.mxu0 0
        %394 = vmatpush2.bf16.msra.mxu0 0
        %395 = vmatprep.subr.bf16.mxu0 0
        %396 = vmatpush2.bf16.msra.mxu0 0
        %397 = vmatprep.subr.bf16.mxu0 0
        %398 = vmatpush2.bf16.msra.mxu0 0
        %399 = vmatprep.subr.bf16.mxu0 0
        %400 = vmatpush2.bf16.msra.mxu0 0
        %401 = vmatprep.subr.bf16.mxu0 0
        %402 = vmatpush2.bf16.msra.mxu0 0
        %403 = vmatprep.subr.bf16.mxu0 0
        %404 = vmatpush2.bf16.msra.mxu0 0
        %405 = vmatprep.subr.bf16.mxu0 0
        %406 = vmatpush2.bf16.msra.mxu0 0
        %407 = vmatprep.mubr.bf16.mxu0 0
        %408 = vmatmul.mubr.bf16.gmra.mxu0 %v373
        %v409 = vpop.f32.mrf.mxu0
        %v410 = vadd.f32 %v354, %v409
        %v411 = vpop.f32.mrf.mxu0
        %v412 = vadd.f32 %v358, %v411
        %v413 = vpop.f32.mrf.mxu0
        %v414 = vpop.f32.mrf.mxu0
        %415 = vdwg.mxu0
        %s416 = sld [smem:[#allocation2]]
        %vm417 = vcmp.ge.f32.partialorder %v410, 0.0
        %v418 = vstv %s416
        %v419 = vmul.f32 %v418, %v410
        %v420 = vsel %vm417, %v410, %v419
        %v421 = vpack.c.bf16 %v420, %v420
        %v422 = vld [vmem:[#allocation6] sm:$0xf]
        %v423 = vld [vmem:[#allocation6 + $0x4] sm:$0xf]
        %v424 = vld [vmem:[#allocation6 + $0x8] sm:$0xf]
        %v425 = vld [vmem:[#allocation6 + $0xc] sm:$0xf]
        %v426 = vld [vmem:[#allocation6 + $0x10] sm:$0xf]
        %v427 = vld [vmem:[#allocation6 + $0x14] sm:$0xf]
        %v428 = vld [vmem:[#allocation6 + $0x18] sm:$0xf]
        %v429 = vld [vmem:[#allocation6 + $0x1c] sm:$0xf]
        %v430 = vld [vmem:[#allocation6 + $0x20] sm:$0xf]
        %v431 = vld [vmem:[#allocation6 + $0x24] sm:$0xf]
        %v432 = vld [vmem:[#allocation6 + $0x28] sm:$0xf]
        %v433 = vld [vmem:[#allocation6 + $0x2c] sm:$0xf]
        %v434 = vld [vmem:[#allocation6 + $0x30] sm:$0xf]
        %v435 = vld [vmem:[#allocation6 + $0x34] sm:$0xf]
        %v436 = vld [vmem:[#allocation6 + $0x38] sm:$0xf]
        %v437 = vld [vmem:[#allocation6 + $0x3c] sm:$0xf]
        %v438 = vld [vmem:[%s5] sm:$0x1]
        %v440 = vlaneseq
        %v441 = vshrl.u32 %v440, 7
        %v442 = vsub.s32 0, %v441
        %v443 = vrot.slane %v438, %v442
        %v461 = vunpack.c.l.b16 %v422
        %v462 = vunpack.c.l.b16 %v423
        %v463 = vunpack.c.l.b16 %v424
        %v464 = vunpack.c.l.b16 %v425
        %v465 = vunpack.c.l.b16 %v426
        %v466 = vunpack.c.l.b16 %v427
        %v467 = vunpack.c.l.b16 %v428
        %v468 = vunpack.c.l.b16 %v429
        %v469 = vunpack.c.l.b16 %v430
        %v470 = vunpack.c.l.b16 %v431
        %v471 = vunpack.c.l.b16 %v432
        %v472 = vunpack.c.l.b16 %v433
        %v473 = vunpack.c.l.b16 %v434
        %v474 = vunpack.c.l.b16 %v435
        %v475 = vunpack.c.l.b16 %v436
        %v476 = vunpack.c.l.b16 %v437
        %v477 = vpack.c.b16 %v462, %v461
        %v478 = vpack.c.b16 %v464, %v463
        %v479 = vpack.c.b16 %v466, %v465
        %v480 = vpack.c.b16 %v468, %v467
        %v481 = vpack.c.b16 %v470, %v469
        %v482 = vpack.c.b16 %v472, %v471
        %v483 = vpack.c.b16 %v474, %v473
        %v484 = vpack.c.b16 %v476, %v475
        %493 = vmatprep.subr.bf16.mxu0 0
        %494 = vmatpush1.bf16.msra.mxu0 %v484
        %495 = vmatprep.subr.bf16.mxu0 0
        %496 = vmatpush1.bf16.msra.mxu0 %v483
        %497 = vmatprep.subr.bf16.mxu0 0
        %498 = vmatpush1.bf16.msra.mxu0 %v482
        %499 = vmatprep.subr.bf16.mxu0 0
        %500 = vmatpush1.bf16.msra.mxu0 %v481
        %501 = vmatprep.subr.bf16.mxu0 0
        %502 = vmatpush1.bf16.msra.mxu0 %v480
        %503 = vmatprep.subr.bf16.mxu0 0
        %504 = vmatpush1.bf16.msra.mxu0 %v479
        %505 = vmatprep.subr.bf16.mxu0 0
        %506 = vmatpush1.bf16.msra.mxu0 %v478
        %507 = vmatprep.subr.bf16.mxu0 0
        %508 = vmatpush1.bf16.msra.mxu0 %v477
        %509 = vmatprep.subr.bf16.mxu0 0
        %510 = vmatpush2.bf16.msra.mxu0 0
        %511 = vmatprep.subr.bf16.mxu0 0
        %512 = vmatpush2.bf16.msra.mxu0 0
        %513 = vmatprep.subr.bf16.mxu0 0
        %514 = vmatpush2.bf16.msra.mxu0 0
        %515 = vmatprep.subr.bf16.mxu0 0
        %516 = vmatpush2.bf16.msra.mxu0 0
        %517 = vmatprep.subr.bf16.mxu0 0
        %518 = vmatpush2.bf16.msra.mxu0 0
        %519 = vmatprep.subr.bf16.mxu0 0
        %520 = vmatpush2.bf16.msra.mxu0 0
        %521 = vmatprep.subr.bf16.mxu0 0
        %522 = vmatpush2.bf16.msra.mxu0 0
        %523 = vmatprep.subr.bf16.mxu0 0
        %524 = vmatpush2.bf16.msra.mxu0 0
        %525 = vmatprep.mubr.bf16.mxu0 0
        %526 = vmatmul.mubr.bf16.gmra.mxu0 %v421
        %v527 = vpop.f32.mrf.mxu0
        %v528 = vadd.f32 %v443, %v527
        %v529 = vpop.f32.mrf.mxu0
        %v530 = vpop.f32.mrf.mxu0
        %v531 = vpop.f32.mrf.mxu0
        %532 = vdwg.mxu0
        %s533 = sld [smem:[#allocation2 + $0x1]]
        %vm534 = vcmp.ge.f32.partialorder %v528, 0.0
        %v535 = vstv %s533
        %v536 = vmul.f32 %v535, %v528
        %v537 = vsel %vm534, %v528, %v536
        %v538 = vpack.c.bf16 %v537, %v537
        %v539 = vld [vmem:[#allocation7] sm:$0xf]
        %v540 = vld [vmem:[#allocation7 + $0x4] sm:$0xf]
        %v541 = vld [vmem:[#allocation7 + $0x8] sm:$0xf]
        %v542 = vld [vmem:[#allocation7 + $0xc] sm:$0xf]
        %v543 = vld [vmem:[#allocation7 + $0x10] sm:$0xf]
        %v544 = vld [vmem:[#allocation7 + $0x14] sm:$0xf]
        %v545 = vld [vmem:[#allocation7 + $0x18] sm:$0xf]
        %v546 = vld [vmem:[#allocation7 + $0x1c] sm:$0xf]
        %v547 = vld [vmem:[#allocation7 + $0x20] sm:$0xf]
        %v548 = vld [vmem:[#allocation7 + $0x24] sm:$0xf]
        %v549 = vld [vmem:[#allocation7 + $0x28] sm:$0xf]
        %v550 = vld [vmem:[#allocation7 + $0x2c] sm:$0xf]
        %v551 = vld [vmem:[#allocation7 + $0x30] sm:$0xf]
        %v552 = vld [vmem:[#allocation7 + $0x34] sm:$0xf]
        %v553 = vld [vmem:[#allocation7 + $0x38] sm:$0xf]
        %v554 = vld [vmem:[#allocation7 + $0x3c] sm:$0xf]
        %v555 = vld [vmem:[%s7] sm:$0x1]
        %v557 = vlaneseq
        %v558 = vshrl.u32 %v557, 7
        %v559 = vsub.s32 0, %v558
        %v560 = vrot.slane %v555, %v559
        %v578 = vunpack.c.l.b16 %v539
        %v579 = vunpack.c.l.b16 %v540
        %v580 = vunpack.c.l.b16 %v541
        %v581 = vunpack.c.l.b16 %v542
        %v582 = vunpack.c.l.b16 %v543
        %v583 = vunpack.c.l.b16 %v544
        %v584 = vunpack.c.l.b16 %v545
        %v585 = vunpack.c.l.b16 %v546
        %v586 = vunpack.c.l.b16 %v547
        %v587 = vunpack.c.l.b16 %v548
        %v588 = vunpack.c.l.b16 %v549
        %v589 = vunpack.c.l.b16 %v550
        %v590 = vunpack.c.l.b16 %v551
        %v591 = vunpack.c.l.b16 %v552
        %v592 = vunpack.c.l.b16 %v553
        %v593 = vunpack.c.l.b16 %v554
        %v594 = vpack.c.b16 %v579, %v578
        %v595 = vpack.c.b16 %v581, %v580
        %v596 = vpack.c.b16 %v583, %v582
        %v597 = vpack.c.b16 %v585, %v584
        %v598 = vpack.c.b16 %v587, %v586
        %v599 = vpack.c.b16 %v589, %v588
        %v600 = vpack.c.b16 %v591, %v590
        %v601 = vpack.c.b16 %v593, %v592
        %610 = vmatprep.subr.bf16.mxu0 0
        %611 = vmatpush1.bf16.msra.mxu0 %v601
        %612 = vmatprep.subr.bf16.mxu0 0
        %613 = vmatpush1.bf16.msra.mxu0 %v600
        %614 = vmatprep.subr.bf16.mxu0 0
        %615 = vmatpush1.bf16.msra.mxu0 %v599
        %616 = vmatprep.subr.bf16.mxu0 0
        %617 = vmatpush1.bf16.msra.mxu0 %v598
        %618 = vmatprep.subr.bf16.mxu0 0
        %619 = vmatpush1.bf16.msra.mxu0 %v597
        %620 = vmatprep.subr.bf16.mxu0 0
        %621 = vmatpush1.bf16.msra.mxu0 %v596
        %622 = vmatprep.subr.bf16.mxu0 0
        %623 = vmatpush1.bf16.msra.mxu0 %v595
        %624 = vmatprep.subr.bf16.mxu0 0
        %625 = vmatpush1.bf16.msra.mxu0 %v594
        %626 = vmatprep.subr.bf16.mxu0 0
        %627 = vmatpush2.bf16.msra.mxu0 0
        %628 = vmatprep.subr.bf16.mxu0 0
        %629 = vmatpush2.bf16.msra.mxu0 0
        %630 = vmatprep.subr.bf16.mxu0 0
        %631 = vmatpush2.bf16.msra.mxu0 0
        %632 = vmatprep.subr.bf16.mxu0 0
        %633 = vmatpush2.bf16.msra.mxu0 0
        %634 = vmatprep.subr.bf16.mxu0 0
        %635 = vmatpush2.bf16.msra.mxu0 0
        %636 = vmatprep.subr.bf16.mxu0 0
        %637 = vmatpush2.bf16.msra.mxu0 0
        %638 = vmatprep.subr.bf16.mxu0 0
        %639 = vmatpush2.bf16.msra.mxu0 0
        %640 = vmatprep.subr.bf16.mxu0 0
        %641 = vmatpush2.bf16.msra.mxu0 0
        %642 = vmatprep.mubr.bf16.mxu0 0
        %643 = vmatmul.mubr.bf16.gmra.mxu0 %v538
        %v644 = vpop.f32.mrf.mxu0
        %v645 = vadd.f32 %v560, %v644
        %v646 = vpop.f32.mrf.mxu0
        %v647 = vpop.f32.mrf.mxu0
        %v648 = vpop.f32.mrf.mxu0
        %649 = vdwg.mxu0
        %s650 = sld [smem:[#allocation2 + $0x2]]
        %vm651 = vcmp.ge.f32.partialorder %v645, 0.0
        %v652 = vstv %s650
        %v653 = vmul.f32 %v652, %v645
        %v654 = vsel %vm651, %v645, %v653
        %v655 = vadd.f32 %v654, %v412
        %v656 = vpack.c.bf16 %v655, %v655
        %657 = vst [vmem:[%s340] sm:$0xf] %v656
        %s658 = sand.u32 %s206, 1
        %s659 = scalar_lea.sflag [#allocation4], %s658
        %s660 = sand.u32 %s206, 1
        %s661 = smul.addr %s660, 4
        %s662 = scalar_lea.vmem [#allocation9], %s661
        // Predicated region
        $region65: #{tpu_custom_call.1} parent=51 // pred_check
          %p663 = pneg %p216
        $region66: #{tpu_custom_call.1} parent=51 // pred_check_branch
          %665 = sbr.rel (%p663) target = $region68
        $region67: #{tpu_custom_call.1} parent=51 // pred_region
          %s667 = ssub.s32 64, 64
          %668 = vsyncadd %s659, %s667
          %s669 = smul.addr %s25, 64
          %s670 = scalar_lea.hbm %s8, %s669
          %s672 = sshll.u32 %s662, 4
          %s673 = int_to_ptr.vmem [resolvable:$true] %s672
          %675 = dma.vmem_to_hbm [thread:$0]  %s673, 64, %s670, %s659
        $region68: #{tpu_custom_call.1} parent=51 // pred_fallthru
          _
      $region52: #{tpu_custom_call.1} parent=5 // pred_fallthru
        _
      %p676 = scmp.le.s32.totalorder 2, %s20
      // Predicated region
      $region69: #{tpu_custom_call.1} parent=5 // pred_check
        %p677 = pneg %p676
      $region70: #{tpu_custom_call.1} parent=5 // pred_check_branch
        %679 = sbr.rel (%p677) target = $region72
      $region71: #{tpu_custom_call.1} parent=5 // pred_region
        %s680 = ssub.s32 %s20, 2
        // Predicated region
        $region73: #{tpu_custom_call.1} parent=71 // pred_check
          %p681 = pneg %p222
        $region74: #{tpu_custom_call.1} parent=71 // pred_check_branch
          %683 = sbr.rel (%p681) target = $region76
        $region75: #{tpu_custom_call.1} parent=71 // pred_region
          %s684 = sand.u32 %s207, 1
          %s685 = scalar_lea.sflag [#allocation4], %s684
          %s686 = sand.u32 %s207, 1
          %s687 = smul.addr %s686, 4
          %s688 = scalar_lea.vmem [#allocation9], %s687
          %689 = dma.done %s685, 64
        $region76: #{tpu_custom_call.1} parent=71 // pred_fallthru
          _
      $region72: #{tpu_custom_call.1} parent=5 // pred_fallthru
        _
    $region6: #{tpu_custom_call.1} parent=1 // loop_footer
      %s24 = sadd.s32 1, %s20
    $region7: #{tpu_custom_call.1} parent=1 // loop_footer_branch
      %19 = sbr.rel target = $region3
    $region8: #{tpu_custom_call.1} parent=1 // loop_exit
      _
    %690 = vsyncpa [#allocation3], 1
    %s691 = scalar_lea.sflag [#allocation3], 1
    %692 = vsyncpa %s691, 1
    %693 = vsyncpa [#allocation8], 1
    %694 = vsyncpa [#allocation4], 1
    %s695 = scalar_lea.sflag [#allocation4], 1
    %696 = vsyncpa %s695, 1
    %697 = vsyncpa [#allocation5], 1
    %s698 = scalar_lea.sflag [#allocation5], 1
    %699 = vsyncpa %s698, 1

</llo_original>
